<compile_context>
chip_gen: v7x
topology: tpu7x:2x2x1
jax: 0.10.0
libtpu: 0.0.40
codegen_flags: <defaults>
</compile_context>

<pallas_src>
import functools

import jax
import jax.numpy as jnp
from jax.experimental import pallas as pl
from jax.experimental.pallas import tpu as pltpu

_MIB = 1024 * 1024


def _round_up(v, m):
    return (v + m - 1) // m * m


def _cdiv(a, b):
    return (a + b - 1) // b


# --------------------------------------------------------------------------- #
# Hardware-aware planning helpers
# --------------------------------------------------------------------------- #
def _tpu_generation():
    try:
        kind = jax.devices()[0].device_kind.lower()
    except Exception:
        return "unknown"
    if "v7" in kind:
        return "v7x"
    if "v6" in kind:
        return "v6e"
    if "v5 lite" in kind or "v5e" in kind or "v5lite" in kind:
        return "v5e"
    return "unknown"


def _vmem_capacity_bytes():
    try:
        return int(pltpu.get_tpu_info().vmem_capacity_bytes)
    except Exception:
        return 64 * _MIB  # conservative (v7x-sized)


# (tm_target, th_target): arithmetic intensity per weight byte is ~tm FLOP/byte,
# so tm must cross the HBM ridge (v6e ~650 -> 1024, v5e ~240 -> 256); v7x has only
# 64 MiB VMEM so it starts smaller and relies on the budget shrink below.
_GEN_TILE_TARGETS = {
    "v5e": (256, 256),
    "v6e": (1024, 512),
    "v7x": (512, 256),
    "unknown": (512, 256),
}


def _streamed_vmem_bytes(tm, th, d, o_pad, x_item, out_item, x_buffers):
    w1 = 2 * d * (2 * th) * 2            # double-buffered bf16 packed fc1 tile
    w2 = 2 * th * o_pad * 2              # double-buffered bf16 fc2 tile
    x = x_buffers * tm * d * x_item
    out = 2 * tm * o_pad * out_item
    acc = tm * o_pad * 4
    interm = 12 * tm * th                # f32 fc1 result + bf16 h + slack
    return w1 + w2 + x + out + acc + interm


def _resident_vmem_bytes(tm, h_pad, d, o_pad, x_item, out_item):
    w = 2 * (d * 2 * h_pad + h_pad * o_pad) * 2   # weights (budgeted double-buffered)
    x = 2 * tm * d * x_item
    out = 2 * tm * o_pad * out_item
    interm = 12 * tm * h_pad
    return w + x + out + interm


# --------------------------------------------------------------------------- #
# One-time weight preprocessing (hoist out of the per-call path)
# --------------------------------------------------------------------------- #
def prepare_gated_mlp_weights(w1, w2, *, compute_dtype=jnp.bfloat16,
                              th=None, force_streamed=False):
    """w1: (D, 2H) = fc1.weight.T, w2: (H, O) = fc2.weight.T.

    Returns (w1_packed, w2_padded, meta).  w1 is packed per hidden tile as
    [value_k | gate_k] so the kernel does a single fused fc1 matmul per tile.
    Call this once and reuse the result (gated_mlp_prepared) — it reads/writes
    every weight tensor and must not sit on the per-step hot path.
    """
    D, two_h = w1.shape
    H = two_h // 2
    Hw2, O = w2.shape
    assert Hw2 == H, "fc1/fc2 hidden dims disagree"

    gen = _tpu_generation()
    cap = _vmem_capacity_bytes()
    vmem_limit = max(32 * _MIB, int(cap * 0.82))
    budget = int(vmem_limit * 0.9)

    O_pad = _round_up(O, 128)            # lane-dense output block
    h_full = _round_up(H, 128)

    # Weight-resident fast path: whole (D,2H)/(H,O) stay in VMEM, no H grid axis,
    # no accumulator.  Budgeted with double-buffered weights (conservative).
    resident = (not force_streamed) and (
        _resident_vmem_bytes(128, h_full, D, O_pad, 4, 4) <= budget)
    # TODO(synk): a pl.Buffered(1) weight spec would roughly double the resident
    # threshold (constant-index blocks do not need a second buffer).

    if resident:
        th_eff = h_full
    else:
        _, th_target = _GEN_TILE_TARGETS[gen]
        th_eff = th if th is not None else th_target
        th_eff = max(128, min(_round_up(th_eff, 128), h_full))
        # Keep per-step streamed weight tiles inside the budget even at small tm.
        while th_eff > 128 and _streamed_vmem_bytes(
                128, th_eff, D, O_pad, 4, 4, 2) > budget:
            th_eff = max(128, _round_up(th_eff // 2, 128))

    H_pad = _round_up(H, th_eff)
    nk = H_pad // th_eff

    # Split fused fc1 weight into value/gate halves (torch .chunk(2, -1) order),
    # pad each half to H_pad, and interleave per hidden tile: [v_0|g_0|v_1|g_1|...].
    w1v = jnp.pad(w1[:, :H], ((0, 0), (0, H_pad - H))).astype(compute_dtype)
    w1g = jnp.pad(w1[:, H:], ((0, 0), (0, H_pad - H))).astype(compute_dtype)
    w1_packed = jnp.stack(
        [w1v.reshape(D, nk, th_eff), w1g.reshape(D, nk, th_eff)], axis=2
    ).reshape(D, 2 * H_pad)
    # Padded H rows of W2 are zero and padded O columns are sliced off at the end.
    w2_padded = jnp.pad(w2, ((0, H_pad - H), (0, O_pad - O))).astype(compute_dtype)

    meta = dict(D=int(D), H=int(H), O=int(O), H_pad=int(H_pad), O_pad=int(O_pad),
                th=int(th_eff), nk=int(nk), resident=bool(resident), gen=gen,
                vmem_limit=int(vmem_limit), budget=int(budget))
    return w1_packed, w2_padded, meta


# --------------------------------------------------------------------------- #
# Kernels
# --------------------------------------------------------------------------- #
def _gated_mlp_resident_kernel(x_ref, w1_ref, w2_ref, o_ref, *, hidden):
    # x_ref: (tm, D); w1_ref: (D, 2*hidden) packed [value | gate]; w2_ref: (hidden, O_pad)
    x = x_ref[...].astype(w1_ref.dtype)                       # in-kernel bf16 cast
    y = jnp.dot(x, w1_ref[...], preferred_element_type=jnp.float32)   # (tm, 2*hidden)
    a, g = y[:, :hidden], y[:, hidden:]
    h = a * (g * jax.lax.logistic(g))                          # value * silu(gate), f32
    o_ref[...] = jnp.dot(h.astype(w2_ref.dtype), w2_ref[...],
                         preferred_element_type=jnp.float32).astype(o_ref.dtype)


def _gated_mlp_streamed_kernel(x_ref, w1_ref, w2_ref, o_ref, acc_ref, *, th):
    # Grid = (M tiles, H tiles); H is the fc2 contraction axis -> f32 accumulator.
    k = pl.program_id(1)

    @pl.when(k == 0)
    def _init():
        acc_ref[...] = jnp.zeros_like(acc_ref)

    x = x_ref[...].astype(w1_ref.dtype)                        # in-kernel bf16 cast
    y = jnp.dot(x, w1_ref[...], preferred_element_type=jnp.float32)   # (tm, 2*th)
    a, g = y[:, :th], y[:, th:]
    h = a * (g * jax.lax.logistic(g))
    acc_ref[...] += jnp.dot(h.astype(w2_ref.dtype), w2_ref[...],
                            preferred_element_type=jnp.float32)

    @pl.when(k == pl.num_programs(1) - 1)
    def _finalize():
        o_ref[...] = acc_ref[...].astype(o_ref.dtype)


# --------------------------------------------------------------------------- #
# Launch wrappers
# --------------------------------------------------------------------------- #
@functools.partial(
    jax.jit,
    static_argnames=("tm", "th", "h_pad", "o_dim", "o_pad", "resident",
                     "vmem_limit", "single_buffer_x"))
def _gated_mlp_call(x2, w1p, w2p, *, tm, th, h_pad, o_dim, o_pad, resident,
                    vmem_limit, single_buffer_x):
    M, D = x2.shape
    out_dtype = x2.dtype
    m_pad = _round_up(M, tm)
    if m_pad != M:                        # skip the pad pass when M is tile aligned
        x2 = jnp.pad(x2, ((0, m_pad - M), (0, 0)))
    grid_m = m_pad // tm
    x_item = x2.dtype.itemsize
    w_item = w1p.dtype.itemsize
    out_item = jnp.dtype(out_dtype).itemsize

    if resident:
        grid = (grid_m,)
        kernel = functools.partial(_gated_mlp_resident_kernel, hidden=h_pad)
        in_specs = [
            pl.BlockSpec((tm, D), lambda i: (i, 0)),
            pl.BlockSpec((D, 2 * h_pad), lambda i: (0, 0)),       # resident fc1
            pl.BlockSpec((h_pad, o_pad), lambda i: (0, 0)),       # resident fc2
        ]
        out_specs = pl.BlockSpec((tm, o_pad), lambda i: (i, 0))
        scratch = ()
        semantics = ("parallel",)
        weight_reads = 1
    else:
        nk = h_pad // th
        grid = (grid_m, nk)
        kernel = functools.partial(_gated_mlp_streamed_kernel, th=th)
        x_spec_kwargs = {}
        if single_buffer_x:
            # x block index (i, 0) is constant across k -> second buffer is dead weight.
            x_spec_kwargs = dict(pipeline_mode=pl.Buffered(1))
        in_specs = [
            pl.BlockSpec((tm, D), lambda i, k: (i, 0), **x_spec_kwargs),
            pl.BlockSpec((D, 2 * th), lambda i, k: (0, k)),        # packed [v_k | g_k]
            pl.BlockSpec((th, o_pad), lambda i, k: (k, 0)),        # fc2 slab
        ]
        out_specs = pl.BlockSpec((tm, o_pad), lambda i, k: (i, 0))
        scratch = (pltpu.VMEM((tm, o_pad), jnp.float32),)
        semantics = ("parallel", "arbitrary")
        weight_reads = grid_m             # weights re-streamed once per M tile

    cost = pl.CostEstimate(
        flops=2 * m_pad * D * 2 * h_pad + 2 * m_pad * h_pad * o_pad,
        transcendentals=m_pad * h_pad,
        bytes_accessed=(m_pad * D * x_item
                        + weight_reads * (w1p.size + w2p.size) * w_item
                        + m_pad * o_pad * out_item),
    )

    out = pl.pallas_call(
        kernel,
        out_shape=jax.ShapeDtypeStruct((m_pad, o_pad), out_dtype),
        grid_spec=pltpu.PrefetchScalarGridSpec(
            num_scalar_prefetch=0,
            grid=grid,
            in_specs=in_specs,
            out_specs=out_specs,
            scratch_shapes=scratch,
        ),
        compiler_params=pltpu.CompilerParams(
            dimension_semantics=semantics,
            vmem_limit_bytes=vmem_limit,
        ),
        cost_estimate=cost,
    )(x2, w1p, w2p)

    return out[:M, :o_dim]


def gated_mlp_prepared(x, prepared, *, tm=None):
    """Run GatedMLP with weights from prepare_gated_mlp_weights() (hoisted prep)."""
    w1p, w2p, meta = prepared
    D = meta["D"]
    assert x.shape[-1] == D
    orig_shape = x.shape
    x2 = x.reshape(-1, D)
    M = x2.shape[0]

    gen = meta["gen"]
    budget = meta["budget"]
    x_item = x2.dtype.itemsize
    out_item = x_item
    tm_target, _ = _GEN_TILE_TARGETS[gen]
    tm_eff = tm if tm is not None else tm_target
    tm_eff = max(16, min(_round_up(tm_eff, 16), _round_up(M, 16)))

    # v7x: two TensorCores share the ("parallel") M axis; avoid a single M tile.
    if tm is None and gen == "v7x" and M > 256 and _cdiv(M, tm_eff) == 1:
        tm_eff = _round_up(_cdiv(M, 2), 16)

    single_buffer_x = False
    if meta["resident"]:
        while tm_eff > 128 and _resident_vmem_bytes(
                tm_eff, meta["H_pad"], D, meta["O_pad"], x_item, out_item) > budget:
            tm_eff = _round_up(tm_eff // 2, 16)
    else:
        def ws(t, xbuf):
            return _streamed_vmem_bytes(t, meta["th"], D, meta["O_pad"],
                                        x_item, out_item, xbuf)
        while tm_eff > 128 and ws(tm_eff, 2) > budget:
            tm_eff = _round_up(tm_eff // 2, 16)
        if ws(tm_eff, 2) > budget:
            single_buffer_x = True        # v7x VMEM relief: drop dead 2nd x buffer

    out = _gated_mlp_call(
        x2, w1p, w2p,
        tm=int(tm_eff), th=int(meta["th"]), h_pad=int(meta["H_pad"]),
        o_dim=int(meta["O"]), o_pad=int(meta["O_pad"]),
        resident=bool(meta["resident"]), vmem_limit=int(meta["vmem_limit"]),
        single_buffer_x=bool(single_buffer_x))
    return out.reshape(orig_shape[:-1] + (meta["O"],))


def gated_mlp(x, w1, w2, *, compute_dtype=jnp.bfloat16, tm=None, th=None,
              force_streamed=False):
    """Convenience wrapper (prep + run).  For repeated calls hoist the prep:
    prepared = prepare_gated_mlp_weights(w1, w2); gated_mlp_prepared(x, prepared)."""
    prepared = prepare_gated_mlp_weights(
        w1, w2, compute_dtype=compute_dtype, th=th, force_streamed=force_streamed)
    return gated_mlp_prepared(x, prepared, tm=tm)


# --------------------------------------------------------------------------- #
# References & test
# --------------------------------------------------------------------------- #
def _ref_gated_mlp_f32(x, w1, w2):
    y = x @ w1
    a, gate = jnp.split(y, 2, axis=-1)
    return (a * jax.nn.silu(gate)) @ w2


def _ref_gated_mlp_bf16(x, w1, w2, compute_dtype=jnp.bfloat16):
    """Reference with the same mixed-precision recipe as the kernel."""
    H = w1.shape[1] // 2
    xb = x.astype(compute_dtype)
    a = jnp.dot(xb, w1[:, :H].astype(compute_dtype), preferred_element_type=jnp.float32)
    g = jnp.dot(xb, w1[:, H:].astype(compute_dtype), preferred_element_type=jnp.float32)
    h = a * (g * jax.nn.sigmoid(g))
    out = jnp.dot(h.astype(compute_dtype), w2.astype(compute_dtype),
                  preferred_element_type=jnp.float32)
    return out.astype(x.dtype)


def _rand_weights(key, D, H, O):
    k1, k2 = jax.random.split(key)
    b1 = 1.0 / (D ** 0.5)
    b2 = 1.0 / (H ** 0.5)
    w1 = jax.random.uniform(k1, (D, 2 * H), jnp.float32, -b1, b1)  # fc1.weight.T
    w2 = jax.random.uniform(k2, (H, O), jnp.float32, -b2, b2)      # fc2.weight.T
    return w1, w2


if __name__ == "__main__":
    key = jax.random.PRNGKey(0)
    k0, k1, k2, k3 = jax.random.split(key, 4)

    # ---- Test 1: module defaults (weight-resident fast path, hoisted prep) ----
    #   in_features = 32, hidden = ceil((8*32/3)/128)*128 = 128, out = 32
    B, L, D = 2, 8, 32
    H = ((int(8 * D / 3) + 128 - 1) // 128) * 128   # 128
    O = D
    w1, w2 = _rand_weights(k0, D, H, O)
    x = jax.random.normal(k1, (B, L, D), jnp.float32)

    prepared = prepare_gated_mlp_weights(w1, w2)     # one-time prep (cache & reuse)
    out = jax.block_until_ready(gated_mlp_prepared(x, prepared))
    out2 = jax.block_until_ready(gated_mlp_prepared(x, prepared))  # reuses jit cache
    assert out.shape == (B, L, O)
    assert jnp.allclose(out, out2)

    x2d = x.reshape(-1, D)
    ref_mixed = _ref_gated_mlp_bf16(x2d, w1, w2).reshape(B, L, O)
    ref_f32 = _ref_gated_mlp_f32(x2d, w1, w2).reshape(B, L, O)
    assert jnp.allclose(out, ref_mixed, atol=5e-3, rtol=5e-3), "T1 mismatch vs bf16 ref"
    assert jnp.allclose(out, ref_f32, atol=4e-2, rtol=4e-2), "T1 mismatch vs f32 ref"

    # ---- Test 2: streamed multi-tile accumulator path, non-aligned M / H / O ----
    Db, Hb, Ob, Mb = 48, 320, 40, 70
    w1b, w2b = _rand_weights(k2, Db, Hb, Ob)
    xb = jax.random.normal(k3, (Mb, Db), jnp.float32)

    outb = gated_mlp(xb, w1b, w2b, force_streamed=True, th=128, tm=32)
    outb = jax.block_until_ready(outb)
    assert outb.shape == (Mb, Ob)

    refb_mixed = _ref_gated_mlp_bf16(xb, w1b, w2b)
    refb_f32 = _ref_gated_mlp_f32(xb, w1b, w2b)
    assert jnp.allclose(outb, refb_mixed, atol=5e-3, rtol=5e-3), "T2 mismatch vs bf16 ref"
    assert jnp.allclose(outb, refb_f32, atol=4e-2, rtol=4e-2), "T2 mismatch vs f32 ref"

    print("KERNEL_OK")
</pallas_src>

<mosaic_0001>
module attributes {stable_mosaic.version = 11 : i64} {
  func.func @_gated_mlp_resident_kernel(%arg0: i32, %arg1: memref<16x32xf32, #tpu.memory_space<vmem>>, %arg2: memref<32x256xbf16, #tpu.memory_space<vmem>>, %arg3: memref<128x128xbf16, #tpu.memory_space<vmem>>, %arg4: memref<16x128xf32, #tpu.memory_space<vmem>>) attributes {dimension_semantics = [#tpu.dimension_semantics<parallel>], iteration_bounds = array<i64: 1>, scalar_prefetch = 0 : i64, scratch_operands = 0 : i64, tpu.core_type = #tpu.core_type<tc>, window_params = [{transform_indices = @transform_0, window_bounds = array<i64: 16, 32>}, {pipeline_mode = #tpu.pipeline_mode<synchronous>, transform_indices = @transform_1, window_bounds = array<i64: 32, 256>}, {pipeline_mode = #tpu.pipeline_mode<synchronous>, transform_indices = @transform_2, window_bounds = array<i64: 128, 128>}, {transform_indices = @transform_3, window_bounds = array<i64: 16, 128>}]} {
    %c0 = arith.constant 0 : index
    %c0_0 = arith.constant 0 : index
    %0 = vector.load %arg1[%c0, %c0_0] : memref<16x32xf32, #tpu.memory_space<vmem>>, vector<16x32xf32>
    %1 = arith.truncf %0 : vector<16x32xf32> to vector<16x32xbf16>
    %c0_1 = arith.constant 0 : index
    %c0_2 = arith.constant 0 : index
    %2 = vector.load %arg2[%c0_1, %c0_2] : memref<32x256xbf16, #tpu.memory_space<vmem>>, vector<32x256xbf16>
    %cst = arith.constant dense<0.000000e+00> : vector<16x256xf32>
    %3 = tpu.matmul %1, %2, %cst {dimension_numbers = #tpu.dot_dimension_numbers<[1], [0], [0], [1], [0, 0, 1, 1], [], []>} : vector<16x32xbf16>, vector<32x256xbf16>, vector<16x256xf32> -> vector<16x256xf32>
    %4 = vector.extract_strided_slice %3 {offsets = [0, 0], sizes = [16, 128], strides = [1, 1]} : vector<16x256xf32> to vector<16x128xf32>
    %5 = vector.extract_strided_slice %3 {offsets = [0, 128], sizes = [16, 128], strides = [1, 1]} : vector<16x256xf32> to vector<16x128xf32>
    %6 = arith.negf %5 : vector<16x128xf32>
    %7 = math.exp %6 : vector<16x128xf32>
    %cst_3 = arith.constant 1.000000e+00 : f32
    %8 = vector.broadcast %cst_3 : f32 to vector<16x128xf32>
    %9 = arith.addf %8, %7 : vector<16x128xf32>
    %10 = arith.divf %8, %9 : vector<16x128xf32>
    %11 = arith.mulf %5, %10 : vector<16x128xf32>
    %12 = arith.mulf %4, %11 : vector<16x128xf32>
    %13 = arith.truncf %12 : vector<16x128xf32> to vector<16x128xbf16>
    %c0_4 = arith.constant 0 : index
    %c0_5 = arith.constant 0 : index
    %14 = vector.load %arg3[%c0_4, %c0_5] : memref<128x128xbf16, #tpu.memory_space<vmem>>, vector<128x128xbf16>
    %cst_6 = arith.constant dense<0.000000e+00> : vector<16x128xf32>
    %15 = tpu.matmul %13, %14, %cst_6 {dimension_numbers = #tpu.dot_dimension_numbers<[1], [0], [0], [1], [0, 0, 1, 1], [], []>} : vector<16x128xbf16>, vector<128x128xbf16>, vector<16x128xf32> -> vector<16x128xf32>
    %c0_7 = arith.constant 0 : index
    %c0_8 = arith.constant 0 : index
    %16 = vector.load %arg4[%c0_7, %c0_8] : memref<16x128xf32, #tpu.memory_space<vmem>>, vector<16x128xf32>
    tpu.vector_store %arg4[%c0_7, %c0_8], %15 {strides = array<i32>} : memref<16x128xf32, #tpu.memory_space<vmem>>, vector<16x128xf32>,
    return
  }
  func.func @transform_0(%arg0: i32) -> (i32, i32) {
    %c0_i32 = arith.constant 0 : i32
    %c0_i32_0 = arith.constant 0 : i32
    return %arg0, %c0_i32 : i32, i32
  }
  func.func @transform_1(%arg0: i32) -> (i32, i32) {
    %c0_i32 = arith.constant 0 : i32
    %c0_i32_0 = arith.constant 0 : i32
    %c0_i32_1 = arith.constant 0 : i32
    return %c0_i32, %c0_i32_0 : i32, i32
  }
  func.func @transform_2(%arg0: i32) -> (i32, i32) {
    %c0_i32 = arith.constant 0 : i32
    %c0_i32_0 = arith.constant 0 : i32
    %c0_i32_1 = arith.constant 0 : i32
    return %c0_i32, %c0_i32_0 : i32, i32
  }
  func.func @transform_3(%arg0: i32) -> (i32, i32) {
    %c0_i32 = arith.constant 0 : i32
    %c0_i32_0 = arith.constant 0 : i32
    return %arg0, %c0_i32 : i32, i32
  }
}

</mosaic_0001>

<llo_original>
// kernel: _gated_mlp_call.1
$region0: #{_gated_mlp_call.1}
  #allocation0 [shape = 'u32[]', space=smem, size = 0x4, offset = 0x4, fixed_abs, tag = 'smem constant byte address 0x4 - core index']
  #allocation1 [shape = 'u32[144,128]{1,0:T(1,128)}', space=vmem, size = 0x12000, scoped, tag = 'internal scratch']
  %s0 = inlined_call_operand.hbm [shape: f32[16,32], index: 0, kind: input, shape index: {}]
  %s1 = inlined_call_operand.hbm [shape: bf16[32,256], index: 1, kind: input, shape index: {}]
  %s2 = inlined_call_operand.hbm [shape: bf16[128,128], index: 2, kind: input, shape index: {}]
  %s3 = inlined_call_operand.hbm [shape: f32[16,128], index: 3, kind: output, shape index: {}]
  %s4 = sld [smem:[#allocation0]]
  $region34: #{_gated_mlp_call.1} parent=0
    _
  %s6 = ssub.s32 1, %s4
  %s7 = scalar_select 0, %s6, %s4
  $region1: #{_gated_mlp_call.1} parent=0
    #allocation2 [shape = 'u8[8192]{0}', space=vmem, size = 0x2000, scoped, tag = 'input window, operand 0, single buffered']
    #allocation3 [shape = 's32[1]{0}', space=sflag, size = 0x4, scoped, tag = 'scoped memory for _gated_mlp_call.1']
    #allocation4 [shape = 's32[1]{0}', space=sflag, size = 0x4, scoped, tag = 'scoped memory for _gated_mlp_call.1']
    #allocation5 [shape = 'u8[16384]{0}', space=vmem, size = 0x4000, scoped, tag = 'input window, operand 1, single buffered']
    #allocation6 [shape = 's32[1]{0}', space=sflag, size = 0x4, scoped, tag = 'scoped memory for _gated_mlp_call.1']
    #allocation7 [shape = 'u8[32768]{0}', space=vmem, size = 0x8000, scoped, tag = 'input window, operand 2, single buffered']
    #allocation8 [shape = 'u8[8192]{0}', space=vmem, size = 0x2000, scoped, tag = 'output window, operand 0, single buffered']
    %8 = vsyncpa [#allocation3], 0
    %9 = vsyncpa [#allocation6], 0
    %10 = vsyncpa [#allocation4], 0
    // Predicated region
    $region2: #{_gated_mlp_call.1} parent=1 // pred_check
      _
    $region3: #{_gated_mlp_call.1} parent=1 // pred_check_branch
      %12 = sbr.rel (0) target = $region5
    $region4: #{_gated_mlp_call.1} parent=1 // pred_region
      %s14 = ssub.s32 256, 256
      %15 = vsyncadd [#allocation3], %s14
      %s16 = sshll.u32 [#allocation2], 4
      %s17 = int_to_ptr.vmem [resolvable:$true] %s16
      %22 = dma.hbm_to_vmem [thread:$0]  %s0, 256, %s17, [#allocation3], 128, 128, 8
    $region5: #{_gated_mlp_call.1} parent=1 // pred_fallthru
      _
    // Predicated region
    $region6: #{_gated_mlp_call.1} parent=1 // pred_check
      _
    $region7: #{_gated_mlp_call.1} parent=1 // pred_check_branch
      %24 = sbr.rel (0) target = $region9
    $region8: #{_gated_mlp_call.1} parent=1 // pred_region
      %s26 = ssub.s32 512, 512
      %27 = vsyncadd [#allocation6], %s26
      %s28 = sshll.u32 [#allocation5], 4
      %s29 = int_to_ptr.vmem [resolvable:$true] %s28
      %34 = dma.hbm_to_vmem [thread:$0]  %s1, 512, %s29, [#allocation6], 128, 128, 8
    $region9: #{_gated_mlp_call.1} parent=1 // pred_fallthru
      _
    // Predicated region
    $region10: #{_gated_mlp_call.1} parent=1 // pred_check
      _
    $region11: #{_gated_mlp_call.1} parent=1 // pred_check_branch
      %36 = sbr.rel (0) target = $region13
    $region12: #{_gated_mlp_call.1} parent=1 // pred_region
      %s38 = ssub.s32 1024, 1024
      %39 = vsyncadd [#allocation6], %s38
      %s40 = sshll.u32 [#allocation7], 4
      %s41 = int_to_ptr.vmem [resolvable:$true] %s40
      %46 = dma.hbm_to_vmem [thread:$0]  %s2, 1024, %s41, [#allocation6], 64, 64, 4
    $region13: #{_gated_mlp_call.1} parent=1 // pred_fallthru
      _
    // Predicated region
    $region14: #{_gated_mlp_call.1} parent=1 // pred_check
      _
    $region15: #{_gated_mlp_call.1} parent=1 // pred_check_branch
      %48 = sbr.rel (0) target = $region17
    $region16: #{_gated_mlp_call.1} parent=1 // pred_region
      %49 = dma.done [#allocation3], 256
    $region17: #{_gated_mlp_call.1} parent=1 // pred_fallthru
      _
    // Predicated region
    $region18: #{_gated_mlp_call.1} parent=1 // pred_check
      _
    $region19: #{_gated_mlp_call.1} parent=1 // pred_check_branch
      %51 = sbr.rel (0) target = $region21
    $region20: #{_gated_mlp_call.1} parent=1 // pred_region
      %52 = dma.done [#allocation6], 512
    $region21: #{_gated_mlp_call.1} parent=1 // pred_fallthru
      _
    // Predicated region
    $region22: #{_gated_mlp_call.1} parent=1 // pred_check
      _
    $region23: #{_gated_mlp_call.1} parent=1 // pred_check_branch
      %54 = sbr.rel (0) target = $region25
    $region24: #{_gated_mlp_call.1} parent=1 // pred_region
      %55 = dma.done [#allocation6], 1024
    $region25: #{_gated_mlp_call.1} parent=1 // pred_fallthru
      _
    %v57 = vld [vmem:[#allocation2] sm:$0xff]
    %v58 = vld [vmem:[#allocation2 + $0x8] sm:$0xff]
    %v59 = vpack.c.bf16 %v58, %v57
    %v60 = vld [vmem:[#allocation5] sm:$0xff]
    %v61 = vld [vmem:[#allocation5 + $0x8] sm:$0xff]
    %v62 = vld [vmem:[#allocation5 + $0x10] sm:$0xff]
    %v63 = vld [vmem:[#allocation5 + $0x18] sm:$0xff]
    %v68 = vunpack.c.l.b16 %v60
    %v69 = vunpack.c.h.b16 %v60
    %v70 = vunpack.c.l.b16 %v61
    %v71 = vunpack.c.h.b16 %v61
    %v72 = vunpack.c.l.b16 %v62
    %v73 = vunpack.c.h.b16 %v62
    %v74 = vunpack.c.l.b16 %v63
    %v75 = vunpack.c.h.b16 %v63
    %v76 = vpack.c.b16 %v70, %v68
    %v77 = vpack.c.b16 %v71, %v69
    %v78 = vpack.c.b16 %v74, %v72
    %v79 = vpack.c.b16 %v75, %v73
    %vm84 = vcmask 261120
    %v86 = vsel %vm84, %v59, 0
    %88 = vmatprep.subr.bf16.mxu0 %v77
    %89 = vmatpush1.bf16.msra.mxu0 %v76
    %90 = vmatprep.subr.bf16.mxu0 %v79
    %91 = vmatpush1.bf16.msra.mxu0 %v78
    %92 = vmatprep.subr.bf16.mxu0 0
    %93 = vmatpush1.bf16.msra.mxu0 0
    %94 = vmatprep.subr.bf16.mxu0 0
    %95 = vmatpush1.bf16.msra.mxu0 0
    %96 = vmatprep.subr.bf16.mxu0 0
    %97 = vmatpush1.bf16.msra.mxu0 0
    %98 = vmatprep.subr.bf16.mxu0 0
    %99 = vmatpush1.bf16.msra.mxu0 0
    %100 = vmatprep.subr.bf16.mxu0 0
    %101 = vmatpush1.bf16.msra.mxu0 0
    %102 = vmatprep.subr.bf16.mxu0 0
    %103 = vmatpush1.bf16.msra.mxu0 0
    %104 = vmatprep.subr.bf16.mxu0 0
    %105 = vmatpush1.bf16.msra.mxu0 0
    %106 = vmatprep.subr.bf16.mxu0 0
    %107 = vmatpush1.bf16.msra.mxu0 0
    %108 = vmatprep.subr.bf16.mxu0 0
    %109 = vmatpush1.bf16.msra.mxu0 0
    %110 = vmatprep.subr.bf16.mxu0 0
    %111 = vmatpush1.bf16.msra.mxu0 0
    %112 = vmatprep.subr.bf16.mxu0 0
    %113 = vmatpush1.bf16.msra.mxu0 0
    %114 = vmatprep.subr.bf16.mxu0 0
    %115 = vmatpush1.bf16.msra.mxu0 0
    %116 = vmatprep.subr.bf16.mxu0 0
    %117 = vmatpush1.bf16.msra.mxu0 0
    %118 = vmatprep.subr.bf16.mxu0 0
    %119 = vmatpush1.bf16.msra.mxu0 0
    %120 = vmatprep.mubr.bf16.mxu0 0
    %121 = vmatmul.mubr.bf16.gmra.mrb[0].mxu0 %v86
    %v122 = vpop.f32.mrb[0].mxu0
    %v123 = vadd.f32 0.0, %v122
    %v124 = vpop.f32.mrb[0].mxu0
    %v125 = vadd.f32 0.0, %v124
    %v126 = vpop.f32.mrb[0].mxu0
    %v127 = vadd.f32 0.0, %v126
    %v128 = vpop.f32.mrb[0].mxu0
    %v129 = vadd.f32 0.0, %v128
    %130 = vdwg.mxu0
    %v131 = vxor.u32 %v125, 2147483648
    %v132 = vxor.u32 %v129, 2147483648
    %v133 = vmul.f32 %v131, 1.442695
    %v134 = vpow.pop %v133
    %v135 = vmul.f32 %v132, 1.442695
    %v136 = vpow.pop %v135
    %v137 = vadd.f32 %v134, 1.0
    %v138 = vadd.f32 %v136, 1.0
    %v139 = vrcp.pop %v137
    %v140 = vmul.f32 1.0, %v139
    %v141 = vrcp.pop %v138
    %v142 = vmul.f32 1.0, %v141
    %v143 = vmul.f32 %v125, %v140
    %v144 = vmul.f32 %v129, %v142
    %v145 = vmul.f32 %v123, %v143
    %v146 = vmul.f32 %v127, %v144
    %v147 = vpack.c.bf16 %v146, %v145
    %v148 = vld [vmem:[#allocation7] sm:$0xf]
    %v149 = vld [vmem:[#allocation7 + $0x4] sm:$0xf]
    %v150 = vld [vmem:[#allocation7 + $0x8] sm:$0xf]
    %v151 = vld [vmem:[#allocation7 + $0xc] sm:$0xf]
    %v152 = vld [vmem:[#allocation7 + $0x10] sm:$0xf]
    %v153 = vld [vmem:[#allocation7 + $0x14] sm:$0xf]
    %v154 = vld [vmem:[#allocation7 + $0x18] sm:$0xf]
    %v155 = vld [vmem:[#allocation7 + $0x1c] sm:$0xf]
    %v156 = vld [vmem:[#allocation7 + $0x20] sm:$0xf]
    %v157 = vld [vmem:[#allocation7 + $0x24] sm:$0xf]
    %v158 = vld [vmem:[#allocation7 + $0x28] sm:$0xf]
    %v159 = vld [vmem:[#allocation7 + $0x2c] sm:$0xf]
    %v160 = vld [vmem:[#allocation7 + $0x30] sm:$0xf]
    %v161 = vld [vmem:[#allocation7 + $0x34] sm:$0xf]
    %v162 = vld [vmem:[#allocation7 + $0x38] sm:$0xf]
    %v163 = vld [vmem:[#allocation7 + $0x3c] sm:$0xf]
    %v180 = vunpack.c.l.b16 %v148
    %v181 = vunpack.c.l.b16 %v149
    %v182 = vunpack.c.l.b16 %v150
    %v183 = vunpack.c.l.b16 %v151
    %v184 = vunpack.c.l.b16 %v152
    %v185 = vunpack.c.l.b16 %v153
    %v186 = vunpack.c.l.b16 %v154
    %v187 = vunpack.c.l.b16 %v155
    %v188 = vunpack.c.l.b16 %v156
    %v189 = vunpack.c.l.b16 %v157
    %v190 = vunpack.c.l.b16 %v158
    %v191 = vunpack.c.l.b16 %v159
    %v192 = vunpack.c.l.b16 %v160
    %v193 = vunpack.c.l.b16 %v161
    %v194 = vunpack.c.l.b16 %v162
    %v195 = vunpack.c.l.b16 %v163
    %v196 = vpack.c.b16 %v181, %v180
    %v197 = vpack.c.b16 %v183, %v182
    %v198 = vpack.c.b16 %v185, %v184
    %v199 = vpack.c.b16 %v187, %v186
    %v200 = vpack.c.b16 %v189, %v188
    %v201 = vpack.c.b16 %v191, %v190
    %v202 = vpack.c.b16 %v193, %v192
    %v203 = vpack.c.b16 %v195, %v194
    %212 = vmatprep.subr.bf16.mxu0 0
    %213 = vmatpush1.bf16.msra.mxu0 %v196
    %214 = vmatprep.subr.bf16.mxu0 0
    %215 = vmatpush1.bf16.msra.mxu0 %v197
    %216 = vmatprep.subr.bf16.mxu0 0
    %217 = vmatpush1.bf16.msra.mxu0 %v198
    %218 = vmatprep.subr.bf16.mxu0 0
    %219 = vmatpush1.bf16.msra.mxu0 %v199
    %220 = vmatprep.subr.bf16.mxu0 0
    %221 = vmatpush1.bf16.msra.mxu0 %v200
    %222 = vmatprep.subr.bf16.mxu0 0
    %223 = vmatpush1.bf16.msra.mxu0 %v201
    %224 = vmatprep.subr.bf16.mxu0 0
    %225 = vmatpush1.bf16.msra.mxu0 %v202
    %226 = vmatprep.subr.bf16.mxu0 0
    %227 = vmatpush1.bf16.msra.mxu0 %v203
    %228 = vmatprep.subr.bf16.mxu0 0
    %229 = vmatpush1.bf16.msra.mxu0 0
    %230 = vmatprep.subr.bf16.mxu0 0
    %231 = vmatpush1.bf16.msra.mxu0 0
    %232 = vmatprep.subr.bf16.mxu0 0
    %233 = vmatpush1.bf16.msra.mxu0 0
    %234 = vmatprep.subr.bf16.mxu0 0
    %235 = vmatpush1.bf16.msra.mxu0 0
    %236 = vmatprep.subr.bf16.mxu0 0
    %237 = vmatpush1.bf16.msra.mxu0 0
    %238 = vmatprep.subr.bf16.mxu0 0
    %239 = vmatpush1.bf16.msra.mxu0 0
    %240 = vmatprep.subr.bf16.mxu0 0
    %241 = vmatpush1.bf16.msra.mxu0 0
    %242 = vmatprep.subr.bf16.mxu0 0
    %243 = vmatpush1.bf16.msra.mxu0 0
    %244 = vmatprep.mubr.bf16.mxu0 0
    %245 = vmatmul.mubr.bf16.gmra.mrb[0].mxu0 %v147
    %v246 = vpop.f32.mrb[0].mxu0
    %v247 = vadd.f32 0.0, %v246
    %v248 = vpop.f32.mrb[0].mxu0
    %v249 = vpop.f32.mrb[0].mxu0
    %v250 = vadd.f32 0.0, %v249
    %v251 = vpop.f32.mrb[0].mxu0
    %252 = vdwg.mxu0
    %253 = vst [vmem:[#allocation8] sm:$0xff] %v247
    %254 = vst [vmem:[#allocation8 + $0x8] sm:$0xff] %v250
    // Predicated region
    $region26: #{_gated_mlp_call.1} parent=1 // pred_check
      _
    $region27: #{_gated_mlp_call.1} parent=1 // pred_check_branch
      %256 = sbr.rel (0) target = $region29
    $region28: #{_gated_mlp_call.1} parent=1 // pred_region
      %s258 = ssub.s32 256, 256
      %259 = vsyncadd [#allocation4], %s258
      %s260 = sshll.u32 [#allocation8], 4
      %s261 = int_to_ptr.vmem [resolvable:$true] %s260
      %266 = dma.vmem_to_hbm [thread:$0]  %s261, 256, %s3, [#allocation4], 128, 128, 8
    $region29: #{_gated_mlp_call.1} parent=1 // pred_fallthru
      _
    // Predicated region
    $region30: #{_gated_mlp_call.1} parent=1 // pred_check
      _
    $region31: #{_gated_mlp_call.1} parent=1 // pred_check_branch
      %268 = sbr.rel (0) target = $region33
    $region32: #{_gated_mlp_call.1} parent=1 // pred_region
      %269 = dma.done [#allocation4], 256
    $region33: #{_gated_mlp_call.1} parent=1 // pred_fallthru
      _
    %270 = vsyncpa [#allocation3], 1
    %271 = vsyncpa [#allocation6], 1
    %272 = vsyncpa [#allocation4], 1

</llo_original>
